<compile_context>
chip_gen: v6e
topology: v6e:2x2x1
jax: 0.10.0
libtpu: 0.0.40
codegen_flags: <defaults>
</compile_context>

<pallas_src>
import jax
import jax.numpy as jnp
from jax.experimental import pallas as pl
from jax.experimental.pallas import tpu as pltpu


# ----------------------------- Pallas kernel --------------------------------
def generator_kernel(z_ref, w1_ref, b1_ref, w2_ref, b2_ref, w3_ref, b3_ref,
                     out_ref):
    """One (TB, OUT) output slab: 3-layer MLP generator, fused bias+act.

    z_ref: (TB, K_pad) bf16 noise (zero-padded K columns).
    Weights bf16 (VMEM-resident across grid steps), biases f32 (1, dim).
    """
    h1 = jnp.dot(z_ref[...], w1_ref[...],
                 preferred_element_type=jnp.float32)               # (TB, H1) f32
    h1 = jnp.maximum(h1 + b1_ref[...], 0.0)                        # bias + ReLU

    h2 = jnp.dot(h1.astype(jnp.bfloat16), w2_ref[...],
                 preferred_element_type=jnp.float32)               # (TB, H2) f32
    h2 = jnp.maximum(h2 + b2_ref[...], 0.0)                        # bias + ReLU

    h3 = jnp.dot(h2.astype(jnp.bfloat16), w3_ref[...],
                 preferred_element_type=jnp.float32)               # (TB, OUT) f32
    out_ref[...] = jnp.tanh(h3 + b3_ref[...])                      # Tanh output


# ----------------------------- Python wrapper --------------------------------
def _round_up(x, m):
    return ((x + m - 1) // m) * m


def _pick_batch_tile(batch_size):
    """Fat batch tile (amortize per-step overhead) with >=2 steps when B > 8
    so v7x's two TensorCores both get work on the parallel grid axis."""
    B = int(batch_size)
    if B <= 8:
        return 8
    tb = (B + 1) // 2                # ceil(B/2) -> at least 2 grid steps
    tb = _round_up(tb, 8)            # sublane multiple
    return max(8, min(tb, 1024))     # cap: ~1 MB f32 intermediates, VMEM-safe


def gan_generate(noise, params, image_hw):
    """GAN.forward: push N(0,1) noise through the generator -> (B,1,H,W) f32."""
    w1, b1, w2, b2, w3, b3 = params            # w1 already K-padded, bf16 weights
    B, latent = noise.shape
    k_pad = w1.shape[0]
    h1_dim, h2_dim, out_dim = w1.shape[1], w2.shape[1], w3.shape[1]

    # Lane-dense bf16 noise: real noise in the first `latent` columns, zeros in
    # the padded K columns (free on the MXU, no extra EUP/VPU work).
    z = jnp.pad(noise.astype(jnp.bfloat16), ((0, 0), (0, k_pad - latent)))

    TB = _pick_batch_tile(B)
    grid = (pl.cdiv(B, TB),)                   # Pallas clips the last partial block

    # Advisory cost estimate (weights counted once: they are VMEM-resident).
    flops = 2 * B * (k_pad * h1_dim + h1_dim * h2_dim + h2_dim * out_dim)
    transcendentals = B * out_dim              # tanh
    bytes_accessed = (
        2 * B * k_pad                                              # bf16 noise in
        + 2 * (int(w1.size) + int(w2.size) + int(w3.size))         # bf16 weights
        + 4 * (int(b1.size) + int(b2.size) + int(b3.size))         # f32 biases
        + 4 * B * out_dim)                                         # f32 output

    def resident(shape):                       # same block every step -> resident
        return pl.BlockSpec(shape, lambda i: (0, 0))

    flat = pl.pallas_call(
        generator_kernel,
        out_shape=jax.ShapeDtypeStruct((B, out_dim), jnp.float32),
        grid_spec=pltpu.PrefetchScalarGridSpec(
            num_scalar_prefetch=0,
            grid=grid,
            in_specs=[
                pl.BlockSpec((TB, k_pad), lambda i: (i, 0)),       # noise tile
                resident(w1.shape), resident(b1.shape),
                resident(w2.shape), resident(b2.shape),
                resident(w3.shape), resident(b3.shape),
            ],
            out_specs=pl.BlockSpec((TB, out_dim), lambda i: (i, 0)),
        ),
        compiler_params=pltpu.CompilerParams(
            dimension_semantics=("parallel",)),
        cost_estimate=pl.CostEstimate(
            flops=flops,
            transcendentals=transcendentals,
            bytes_accessed=bytes_accessed),
    )(z, w1, b1, w2, b2, w3, b3)

    H, W = image_hw
    return flat.reshape(B, 1, H, W)            # NCHW, matching PyTorch output


def init_generator_params(key, latent_dim, h1, h2, out_dim):
    """Mimics torch.nn.Linear default init (f32)."""
    def linear(k, fan_in, fan_out):
        kw, kb = jax.random.split(k)
        bound = 1.0 / float(fan_in) ** 0.5
        w = jax.random.uniform(kw, (fan_in, fan_out), jnp.float32, -bound, bound)
        b = jax.random.uniform(kb, (1, fan_out), jnp.float32, -bound, bound)
        return w, b

    k1, k2, k3 = jax.random.split(key, 3)
    w1, b1 = linear(k1, latent_dim, h1)
    w2, b2 = linear(k2, h1, h2)
    w3, b3 = linear(k3, h2, out_dim)
    return (w1, b1, w2, b2, w3, b3)


def prepare_params(params_f32, latent_dim):
    """Zero-pad w1's K dim to a multiple of 128 and cast weights to bf16."""
    w1, b1, w2, b2, w3, b3 = params_f32
    k_pad = max(128, _round_up(latent_dim, 128))
    w1p = jnp.pad(w1, ((0, k_pad - latent_dim), (0, 0)))
    return (w1p.astype(jnp.bfloat16), b1,
            w2.astype(jnp.bfloat16), b2,
            w3.astype(jnp.bfloat16), b3)


def _reference(noise, params, latent_dim):
    """Pure-JAX reference with the same bf16 casts as the kernel."""
    w1, b1, w2, b2, w3, b3 = params
    k_pad = w1.shape[0]
    z = jnp.pad(noise.astype(jnp.bfloat16), ((0, 0), (0, k_pad - latent_dim)))
    h1 = jnp.maximum(jnp.dot(z, w1, preferred_element_type=jnp.float32) + b1, 0.0)
    h2 = jnp.maximum(jnp.dot(h1.astype(jnp.bfloat16), w2,
                             preferred_element_type=jnp.float32) + b2, 0.0)
    h3 = jnp.dot(h2.astype(jnp.bfloat16), w3, preferred_element_type=jnp.float32)
    return jnp.tanh(h3 + b3)


if __name__ == "__main__":
    # Small shapes consistent with GAN.forward(batch_size):
    #   batch=8, latent_dim=16, hidden 128 -> 128 (lane-dense), image 1x16x16.
    BATCH = 8
    LATENT = 16
    H1, H2 = 128, 128
    IMG_H, IMG_W = 16, 16
    OUT_DIM = IMG_H * IMG_W

    key = jax.random.PRNGKey(0)
    pkey, nkey = jax.random.split(key)

    params_f32 = init_generator_params(pkey, LATENT, H1, H2, OUT_DIM)
    params = prepare_params(params_f32, LATENT)

    # noise ~ N(0, 1), matching torch.randn(batch_size, latent_dim)
    noise = jax.random.normal(nkey, (BATCH, LATENT), jnp.float32)

    fake_image = gan_generate(noise, params, image_hw=(IMG_H, IMG_W))
    fake_image = jax.block_until_ready(fake_image)

    assert fake_image.shape == (BATCH, 1, IMG_H, IMG_W)
    assert fake_image.dtype == jnp.float32
    assert bool(jnp.all(jnp.isfinite(fake_image)))
    assert bool(jnp.all(jnp.abs(fake_image) <= 1.0))        # tanh range

    ref = _reference(noise, params, LATENT).reshape(BATCH, 1, IMG_H, IMG_W)
    max_err = float(jnp.max(jnp.abs(fake_image - ref)))
    assert max_err < 5e-2, f"kernel mismatch vs reference: {max_err}"

    print("KERNEL_OK")
</pallas_src>

<mosaic_0001>
module attributes {stable_mosaic.version = 11 : i64} {
  func.func @generator_kernel(%arg0: i32, %arg1: memref<8x128xbf16, #tpu.memory_space<vmem>>, %arg2: memref<128x128xbf16, #tpu.memory_space<vmem>>, %arg3: memref<1x128xf32, #tpu.memory_space<vmem>>, %arg4: memref<128x128xbf16, #tpu.memory_space<vmem>>, %arg5: memref<1x128xf32, #tpu.memory_space<vmem>>, %arg6: memref<128x256xbf16, #tpu.memory_space<vmem>>, %arg7: memref<1x256xf32, #tpu.memory_space<vmem>>, %arg8: memref<8x256xf32, #tpu.memory_space<vmem>>) attributes {dimension_semantics = [#tpu.dimension_semantics<parallel>], iteration_bounds = array<i64: 1>, scalar_prefetch = 0 : i64, scratch_operands = 0 : i64, tpu.core_type = #tpu.core_type<tc>, window_params = [{transform_indices = @transform_0, window_bounds = array<i64: 8, 128>}, {pipeline_mode = #tpu.pipeline_mode<synchronous>, transform_indices = @transform_1, window_bounds = array<i64: 128, 128>}, {pipeline_mode = #tpu.pipeline_mode<synchronous>, transform_indices = @transform_2, window_bounds = array<i64: 1, 128>}, {pipeline_mode = #tpu.pipeline_mode<synchronous>, transform_indices = @transform_3, window_bounds = array<i64: 128, 128>}, {pipeline_mode = #tpu.pipeline_mode<synchronous>, transform_indices = @transform_4, window_bounds = array<i64: 1, 128>}, {pipeline_mode = #tpu.pipeline_mode<synchronous>, transform_indices = @transform_5, window_bounds = array<i64: 128, 256>}, {pipeline_mode = #tpu.pipeline_mode<synchronous>, transform_indices = @transform_6, window_bounds = array<i64: 1, 256>}, {transform_indices = @transform_7, window_bounds = array<i64: 8, 256>}]} {
    %c0 = arith.constant 0 : index
    %c0_0 = arith.constant 0 : index
    %0 = vector.load %arg1[%c0, %c0_0] : memref<8x128xbf16, #tpu.memory_space<vmem>>, vector<8x128xbf16>
    %c0_1 = arith.constant 0 : index
    %c0_2 = arith.constant 0 : index
    %1 = vector.load %arg2[%c0_1, %c0_2] : memref<128x128xbf16, #tpu.memory_space<vmem>>, vector<128x128xbf16>
    %cst = arith.constant dense<0.000000e+00> : vector<8x128xf32>
    %2 = tpu.matmul %0, %1, %cst {dimension_numbers = #tpu.dot_dimension_numbers<[1], [0], [0], [1], [0, 0, 1, 1], [], []>} : vector<8x128xbf16>, vector<128x128xbf16>, vector<8x128xf32> -> vector<8x128xf32>
    %c0_3 = arith.constant 0 : index
    %c0_4 = arith.constant 0 : index
    %3 = vector.load %arg3[%c0_3, %c0_4] : memref<1x128xf32, #tpu.memory_space<vmem>>, vector<1x128xf32>
    %4 = vector.broadcast %3 : vector<1x128xf32> to vector<8x128xf32>
    %5 = arith.addf %2, %4 : vector<8x128xf32>
    %cst_5 = arith.constant 0.000000e+00 : f32
    %6 = vector.broadcast %cst_5 : f32 to vector<8x128xf32>
    %7 = arith.maximumf %5, %6 : vector<8x128xf32>
    %8 = arith.truncf %7 : vector<8x128xf32> to vector<8x128xbf16>
    %c0_6 = arith.constant 0 : index
    %c0_7 = arith.constant 0 : index
    %9 = vector.load %arg4[%c0_6, %c0_7] : memref<128x128xbf16, #tpu.memory_space<vmem>>, vector<128x128xbf16>
    %cst_8 = arith.constant dense<0.000000e+00> : vector<8x128xf32>
    %10 = tpu.matmul %8, %9, %cst_8 {dimension_numbers = #tpu.dot_dimension_numbers<[1], [0], [0], [1], [0, 0, 1, 1], [], []>} : vector<8x128xbf16>, vector<128x128xbf16>, vector<8x128xf32> -> vector<8x128xf32>
    %c0_9 = arith.constant 0 : index
    %c0_10 = arith.constant 0 : index
    %11 = vector.load %arg5[%c0_9, %c0_10] : memref<1x128xf32, #tpu.memory_space<vmem>>, vector<1x128xf32>
    %12 = vector.broadcast %11 : vector<1x128xf32> to vector<8x128xf32>
    %13 = arith.addf %10, %12 : vector<8x128xf32>
    %cst_11 = arith.constant 0.000000e+00 : f32
    %14 = vector.broadcast %cst_11 : f32 to vector<8x128xf32>
    %15 = arith.maximumf %13, %14 : vector<8x128xf32>
    %16 = arith.truncf %15 : vector<8x128xf32> to vector<8x128xbf16>
    %c0_12 = arith.constant 0 : index
    %c0_13 = arith.constant 0 : index
    %17 = vector.load %arg6[%c0_12, %c0_13] : memref<128x256xbf16, #tpu.memory_space<vmem>>, vector<128x256xbf16>
    %cst_14 = arith.constant dense<0.000000e+00> : vector<8x256xf32>
    %18 = tpu.matmul %16, %17, %cst_14 {dimension_numbers = #tpu.dot_dimension_numbers<[1], [0], [0], [1], [0, 0, 1, 1], [], []>} : vector<8x128xbf16>, vector<128x256xbf16>, vector<8x256xf32> -> vector<8x256xf32>
    %c0_15 = arith.constant 0 : index
    %c0_16 = arith.constant 0 : index
    %19 = vector.load %arg7[%c0_15, %c0_16] : memref<1x256xf32, #tpu.memory_space<vmem>>, vector<1x256xf32>
    %20 = vector.broadcast %19 : vector<1x256xf32> to vector<8x256xf32>
    %21 = arith.addf %18, %20 : vector<8x256xf32>
    %22 = math.tanh %21 : vector<8x256xf32>
    %c0_17 = arith.constant 0 : index
    %c0_18 = arith.constant 0 : index
    %23 = vector.load %arg8[%c0_17, %c0_18] : memref<8x256xf32, #tpu.memory_space<vmem>>, vector<8x256xf32>
    tpu.vector_store %arg8[%c0_17, %c0_18], %22 {strides = array<i32>} : memref<8x256xf32, #tpu.memory_space<vmem>>, vector<8x256xf32>,
    return
  }
  func.func @transform_0(%arg0: i32) -> (i32, i32) {
    %c0_i32 = arith.constant 0 : i32
    %c0_i32_0 = arith.constant 0 : i32
    return %arg0, %c0_i32 : i32, i32
  }
  func.func @transform_1(%arg0: i32) -> (i32, i32) {
    %c0_i32 = arith.constant 0 : i32
    %c0_i32_0 = arith.constant 0 : i32
    %c0_i32_1 = arith.constant 0 : i32
    return %c0_i32, %c0_i32_0 : i32, i32
  }
  func.func @transform_2(%arg0: i32) -> (i32, i32) {
    %c0_i32 = arith.constant 0 : i32
    %c0_i32_0 = arith.constant 0 : i32
    %c0_i32_1 = arith.constant 0 : i32
    return %c0_i32, %c0_i32_0 : i32, i32
  }
  func.func @transform_3(%arg0: i32) -> (i32, i32) {
    %c0_i32 = arith.constant 0 : i32
    %c0_i32_0 = arith.constant 0 : i32
    %c0_i32_1 = arith.constant 0 : i32
    return %c0_i32, %c0_i32_0 : i32, i32
  }
  func.func @transform_4(%arg0: i32) -> (i32, i32) {
    %c0_i32 = arith.constant 0 : i32
    %c0_i32_0 = arith.constant 0 : i32
    %c0_i32_1 = arith.constant 0 : i32
    return %c0_i32, %c0_i32_0 : i32, i32
  }
  func.func @transform_5(%arg0: i32) -> (i32, i32) {
    %c0_i32 = arith.constant 0 : i32
    %c0_i32_0 = arith.constant 0 : i32
    %c0_i32_1 = arith.constant 0 : i32
    return %c0_i32, %c0_i32_0 : i32, i32
  }
  func.func @transform_6(%arg0: i32) -> (i32, i32) {
    %c0_i32 = arith.constant 0 : i32
    %c0_i32_0 = arith.constant 0 : i32
    %c0_i32_1 = arith.constant 0 : i32
    return %c0_i32, %c0_i32_0 : i32, i32
  }
  func.func @transform_7(%arg0: i32) -> (i32, i32) {
    %c0_i32 = arith.constant 0 : i32
    %c0_i32_0 = arith.constant 0 : i32
    return %arg0, %c0_i32 : i32, i32
  }
}

</mosaic_0001>

<llo_original>
// kernel: tpu_custom_call.1
$region0: #{tpu_custom_call.1}
  #allocation0 [shape = 'u32[]', space=smem, size = 0x4, offset = 0x4, fixed_abs, tag = 'smem constant byte address 0x4 - core index']
  #allocation1 [shape = 'u32[144,128]{1,0:T(1,128)}', space=vmem, size = 0x12000, scoped, tag = 'internal scratch']
  %s0 = inlined_call_operand.hbm [shape: bf16[8,128], index: 0, kind: input, shape index: {}]
  %s1 = inlined_call_operand.hbm [shape: bf16[128,128], index: 1, kind: input, shape index: {}]
  %s2 = inlined_call_operand.vmem [shape: f32[1,128], index: 2, kind: input, shape index: {}]
  %s3 = inlined_call_operand.hbm [shape: bf16[128,128], index: 3, kind: input, shape index: {}]
  %s4 = inlined_call_operand.vmem [shape: f32[1,128], index: 4, kind: input, shape index: {}]
  %s5 = inlined_call_operand.hbm [shape: bf16[128,256], index: 5, kind: input, shape index: {}]
  %s6 = inlined_call_operand.vmem [shape: f32[1,256], index: 6, kind: input, shape index: {}]
  %s7 = inlined_call_operand.hbm [shape: f32[8,256], index: 7, kind: output, shape index: {}]
  %s8 = sld [smem:[#allocation0]]
  $region54: #{tpu_custom_call.1} parent=0
    _
  %s10 = ssub.s32 1, %s8
  %s11 = scalar_select 0, %s10, %s8
  $region1: #{tpu_custom_call.1} parent=0
    #allocation2 [shape = 'u8[2048]{0}', space=vmem, size = 0x800, scoped, tag = 'input window, operand 0, single buffered']
    #allocation3 [shape = 's32[1]{0}', space=sflag, size = 0x4, scoped, tag = 'scoped memory for tpu_custom_call.1']
    #allocation4 [shape = 's32[1]{0}', space=sflag, size = 0x4, scoped, tag = 'scoped memory for tpu_custom_call.1']
    #allocation5 [shape = 'u8[32768]{0}', space=vmem, size = 0x8000, scoped, tag = 'input window, operand 1, single buffered']
    #allocation6 [shape = 's32[1]{0}', space=sflag, size = 0x4, scoped, tag = 'scoped memory for tpu_custom_call.1']
    #allocation7 [shape = 'u8[32768]{0}', space=vmem, size = 0x8000, scoped, tag = 'input window, operand 3, single buffered']
    #allocation8 [shape = 'u8[65536]{0}', space=vmem, size = 0x10000, scoped, tag = 'input window, operand 5, single buffered']
    #allocation9 [shape = 's32[1]{0}', space=sflag, size = 0x4, scoped, tag = 'scoped memory for tpu_custom_call.1']
    #allocation10 [shape = 'u8[8192]{0}', space=vmem, size = 0x2000, scoped, tag = 'output window, operand 0, single buffered']
    %12 = vsyncpa [#allocation3], 0
    %13 = vsyncpa [#allocation6], 0
    %14 = vsyncpa [#allocation9], 0
    %15 = vsyncpa [#allocation4], 0
    // Predicated region
    $region2: #{tpu_custom_call.1} parent=1 // pred_check
      _
    $region3: #{tpu_custom_call.1} parent=1 // pred_check_branch
      %17 = sbr.rel (0) target = $region5
    $region4: #{tpu_custom_call.1} parent=1 // pred_region
      %s19 = ssub.s32 64, 64
      %20 = vsyncadd [#allocation3], %s19
      %s22 = sshll.u32 [#allocation2], 4
      %s23 = int_to_ptr.vmem [resolvable:$true] %s22
      %25 = dma.hbm_to_vmem [thread:$0]  %s0, 64, %s23, [#allocation3]
    $region5: #{tpu_custom_call.1} parent=1 // pred_fallthru
      _
    // Predicated region
    $region6: #{tpu_custom_call.1} parent=1 // pred_check
      _
    $region7: #{tpu_custom_call.1} parent=1 // pred_check_branch
      %27 = sbr.rel (0) target = $region9
    $region8: #{tpu_custom_call.1} parent=1 // pred_region
      %s29 = ssub.s32 1024, 1024
      %30 = vsyncadd [#allocation6], %s29
      %s31 = sshll.u32 [#allocation5], 4
      %s32 = int_to_ptr.vmem [resolvable:$true] %s31
      %37 = dma.hbm_to_vmem [thread:$0]  %s1, 1024, %s32, [#allocation6], 64, 64, 4
    $region9: #{tpu_custom_call.1} parent=1 // pred_fallthru
      _
    // Predicated region
    $region10: #{tpu_custom_call.1} parent=1 // pred_check
      _
    $region11: #{tpu_custom_call.1} parent=1 // pred_check_branch
      %39 = sbr.rel (0) target = $region13
    $region12: #{tpu_custom_call.1} parent=1 // pred_region
      _
    $region13: #{tpu_custom_call.1} parent=1 // pred_fallthru
      _
    // Predicated region
    $region14: #{tpu_custom_call.1} parent=1 // pred_check
      _
    $region15: #{tpu_custom_call.1} parent=1 // pred_check_branch
      %41 = sbr.rel (0) target = $region17
    $region16: #{tpu_custom_call.1} parent=1 // pred_region
      %s43 = ssub.s32 1024, 1024
      %44 = vsyncadd [#allocation6], %s43
      %s45 = sshll.u32 [#allocation7], 4
      %s46 = int_to_ptr.vmem [resolvable:$true] %s45
      %51 = dma.hbm_to_vmem [thread:$0]  %s3, 1024, %s46, [#allocation6], 64, 64, 4
    $region17: #{tpu_custom_call.1} parent=1 // pred_fallthru
      _
    // Predicated region
    $region18: #{tpu_custom_call.1} parent=1 // pred_check
      _
    $region19: #{tpu_custom_call.1} parent=1 // pred_check_branch
      %53 = sbr.rel (0) target = $region21
    $region20: #{tpu_custom_call.1} parent=1 // pred_region
      _
    $region21: #{tpu_custom_call.1} parent=1 // pred_fallthru
      _
    // Predicated region
    $region22: #{tpu_custom_call.1} parent=1 // pred_check
      _
    $region23: #{tpu_custom_call.1} parent=1 // pred_check_branch
      %55 = sbr.rel (0) target = $region25
    $region24: #{tpu_custom_call.1} parent=1 // pred_region
      %s57 = ssub.s32 2048, 2048
      %58 = vsyncadd [#allocation9], %s57
      %s59 = sshll.u32 [#allocation8], 4
      %s60 = int_to_ptr.vmem [resolvable:$true] %s59
      %65 = dma.hbm_to_vmem [thread:$0]  %s5, 2048, %s60, [#allocation9], 128, 128, 8
    $region25: #{tpu_custom_call.1} parent=1 // pred_fallthru
      _
    // Predicated region
    $region26: #{tpu_custom_call.1} parent=1 // pred_check
      _
    $region27: #{tpu_custom_call.1} parent=1 // pred_check_branch
      %67 = sbr.rel (0) target = $region29
    $region28: #{tpu_custom_call.1} parent=1 // pred_region
      _
    $region29: #{tpu_custom_call.1} parent=1 // pred_fallthru
      _
    // Predicated region
    $region30: #{tpu_custom_call.1} parent=1 // pred_check
      _
    $region31: #{tpu_custom_call.1} parent=1 // pred_check_branch
      %69 = sbr.rel (0) target = $region33
    $region32: #{tpu_custom_call.1} parent=1 // pred_region
      %70 = dma.done [#allocation3], 64
    $region33: #{tpu_custom_call.1} parent=1 // pred_fallthru
      _
    // Predicated region
    $region34: #{tpu_custom_call.1} parent=1 // pred_check
      _
    $region35: #{tpu_custom_call.1} parent=1 // pred_check_branch
      %72 = sbr.rel (0) target = $region37
    $region36: #{tpu_custom_call.1} parent=1 // pred_region
      %73 = dma.done [#allocation6], 1024
    $region37: #{tpu_custom_call.1} parent=1 // pred_fallthru
      _
    // Predicated region
    $region38: #{tpu_custom_call.1} parent=1 // pred_check
      _
    $region39: #{tpu_custom_call.1} parent=1 // pred_check_branch
      %75 = sbr.rel (0) target = $region41
    $region40: #{tpu_custom_call.1} parent=1 // pred_region
      %76 = dma.done [#allocation6], 1024
    $region41: #{tpu_custom_call.1} parent=1 // pred_fallthru
      _
    // Predicated region
    $region42: #{tpu_custom_call.1} parent=1 // pred_check
      _
    $region43: #{tpu_custom_call.1} parent=1 // pred_check_branch
      %78 = sbr.rel (0) target = $region45
    $region44: #{tpu_custom_call.1} parent=1 // pred_region
      %79 = dma.done [#allocation9], 2048
    $region45: #{tpu_custom_call.1} parent=1 // pred_fallthru
      _
    %v81 = vld [vmem:[#allocation2] sm:$0xf]
    %v82 = vld [vmem:[#allocation5] sm:$0xf]
    %v83 = vld [vmem:[#allocation5 + $0x4] sm:$0xf]
    %v84 = vld [vmem:[#allocation5 + $0x8] sm:$0xf]
    %v85 = vld [vmem:[#allocation5 + $0xc] sm:$0xf]
    %v86 = vld [vmem:[#allocation5 + $0x10] sm:$0xf]
    %v87 = vld [vmem:[#allocation5 + $0x14] sm:$0xf]
    %v88 = vld [vmem:[#allocation5 + $0x18] sm:$0xf]
    %v89 = vld [vmem:[#allocation5 + $0x1c] sm:$0xf]
    %v90 = vld [vmem:[#allocation5 + $0x20] sm:$0xf]
    %v91 = vld [vmem:[#allocation5 + $0x24] sm:$0xf]
    %v92 = vld [vmem:[#allocation5 + $0x28] sm:$0xf]
    %v93 = vld [vmem:[#allocation5 + $0x2c] sm:$0xf]
    %v94 = vld [vmem:[#allocation5 + $0x30] sm:$0xf]
    %v95 = vld [vmem:[#allocation5 + $0x34] sm:$0xf]
    %v96 = vld [vmem:[#allocation5 + $0x38] sm:$0xf]
    %v97 = vld [vmem:[#allocation5 + $0x3c] sm:$0xf]
    %v98 = vld [vmem:[%s2] sm:$0x1]
    %v100 = vlaneseq
    %v101 = vshrl.u32 %v100, 7
    %v102 = vsub.s32 0, %v101
    %v103 = vrot.slane %v98, %v102
    %v121 = vunpack.c.l.b16 %v82
    %v122 = vunpack.c.l.b16 %v83
    %v123 = vunpack.c.l.b16 %v84
    %v124 = vunpack.c.l.b16 %v85
    %v125 = vunpack.c.l.b16 %v86
    %v126 = vunpack.c.l.b16 %v87
    %v127 = vunpack.c.l.b16 %v88
    %v128 = vunpack.c.l.b16 %v89
    %v129 = vunpack.c.l.b16 %v90
    %v130 = vunpack.c.l.b16 %v91
    %v131 = vunpack.c.l.b16 %v92
    %v132 = vunpack.c.l.b16 %v93
    %v133 = vunpack.c.l.b16 %v94
    %v134 = vunpack.c.l.b16 %v95
    %v135 = vunpack.c.l.b16 %v96
    %v136 = vunpack.c.l.b16 %v97
    %v137 = vpack.c.b16 %v122, %v121
    %v138 = vpack.c.b16 %v124, %v123
    %v139 = vpack.c.b16 %v126, %v125
    %v140 = vpack.c.b16 %v128, %v127
    %v141 = vpack.c.b16 %v130, %v129
    %v142 = vpack.c.b16 %v132, %v131
    %v143 = vpack.c.b16 %v134, %v133
    %v144 = vpack.c.b16 %v136, %v135
    %153 = vmatprep.subr.bf16.mxu0 0
    %154 = vmatpush1.bf16.msra.mxu0 %v144
    %155 = vmatprep.subr.bf16.mxu0 0
    %156 = vmatpush1.bf16.msra.mxu0 %v143
    %157 = vmatprep.subr.bf16.mxu0 0
    %158 = vmatpush1.bf16.msra.mxu0 %v142
    %159 = vmatprep.subr.bf16.mxu0 0
    %160 = vmatpush1.bf16.msra.mxu0 %v141
    %161 = vmatprep.subr.bf16.mxu0 0
    %162 = vmatpush1.bf16.msra.mxu0 %v140
    %163 = vmatprep.subr.bf16.mxu0 0
    %164 = vmatpush1.bf16.msra.mxu0 %v139
    %165 = vmatprep.subr.bf16.mxu0 0
    %166 = vmatpush1.bf16.msra.mxu0 %v138
    %167 = vmatprep.subr.bf16.mxu0 0
    %168 = vmatpush1.bf16.msra.mxu0 %v137
    %169 = vmatprep.subr.bf16.mxu0 0
    %170 = vmatpush2.bf16.msra.mxu0 0
    %171 = vmatprep.subr.bf16.mxu0 0
    %172 = vmatpush2.bf16.msra.mxu0 0
    %173 = vmatprep.subr.bf16.mxu0 0
    %174 = vmatpush2.bf16.msra.mxu0 0
    %175 = vmatprep.subr.bf16.mxu0 0
    %176 = vmatpush2.bf16.msra.mxu0 0
    %177 = vmatprep.subr.bf16.mxu0 0
    %178 = vmatpush2.bf16.msra.mxu0 0
    %179 = vmatprep.subr.bf16.mxu0 0
    %180 = vmatpush2.bf16.msra.mxu0 0
    %181 = vmatprep.subr.bf16.mxu0 0
    %182 = vmatpush2.bf16.msra.mxu0 0
    %183 = vmatprep.subr.bf16.mxu0 0
    %184 = vmatpush2.bf16.msra.mxu0 0
    %185 = vmatprep.mubr.bf16.mxu0 0
    %186 = vmatmul.mubr.bf16.gmra.mxu0 %v81
    %v187 = vpop.f32.mrf.mxu0
    %v188 = vadd.f32 %v103, %v187
    %v189 = vpop.f32.mrf.mxu0
    %v190 = vpop.f32.mrf.mxu0
    %v191 = vpop.f32.mrf.mxu0
    %192 = vdwg.mxu0
    %v193 = vmax.f32 %v188, 0.0
    %v194 = vpack.c.bf16 %v193, %v193
    %v195 = vld [vmem:[#allocation7] sm:$0xf]
    %v196 = vld [vmem:[#allocation7 + $0x4] sm:$0xf]
    %v197 = vld [vmem:[#allocation7 + $0x8] sm:$0xf]
    %v198 = vld [vmem:[#allocation7 + $0xc] sm:$0xf]
    %v199 = vld [vmem:[#allocation7 + $0x10] sm:$0xf]
    %v200 = vld [vmem:[#allocation7 + $0x14] sm:$0xf]
    %v201 = vld [vmem:[#allocation7 + $0x18] sm:$0xf]
    %v202 = vld [vmem:[#allocation7 + $0x1c] sm:$0xf]
    %v203 = vld [vmem:[#allocation7 + $0x20] sm:$0xf]
    %v204 = vld [vmem:[#allocation7 + $0x24] sm:$0xf]
    %v205 = vld [vmem:[#allocation7 + $0x28] sm:$0xf]
    %v206 = vld [vmem:[#allocation7 + $0x2c] sm:$0xf]
    %v207 = vld [vmem:[#allocation7 + $0x30] sm:$0xf]
    %v208 = vld [vmem:[#allocation7 + $0x34] sm:$0xf]
    %v209 = vld [vmem:[#allocation7 + $0x38] sm:$0xf]
    %v210 = vld [vmem:[#allocation7 + $0x3c] sm:$0xf]
    %v211 = vld [vmem:[%s4] sm:$0x1]
    %v213 = vlaneseq
    %v214 = vshrl.u32 %v213, 7
    %v215 = vsub.s32 0, %v214
    %v216 = vrot.slane %v211, %v215
    %v234 = vunpack.c.l.b16 %v195
    %v235 = vunpack.c.l.b16 %v196
    %v236 = vunpack.c.l.b16 %v197
    %v237 = vunpack.c.l.b16 %v198
    %v238 = vunpack.c.l.b16 %v199
    %v239 = vunpack.c.l.b16 %v200
    %v240 = vunpack.c.l.b16 %v201
    %v241 = vunpack.c.l.b16 %v202
    %v242 = vunpack.c.l.b16 %v203
    %v243 = vunpack.c.l.b16 %v204
    %v244 = vunpack.c.l.b16 %v205
    %v245 = vunpack.c.l.b16 %v206
    %v246 = vunpack.c.l.b16 %v207
    %v247 = vunpack.c.l.b16 %v208
    %v248 = vunpack.c.l.b16 %v209
    %v249 = vunpack.c.l.b16 %v210
    %v250 = vpack.c.b16 %v235, %v234
    %v251 = vpack.c.b16 %v237, %v236
    %v252 = vpack.c.b16 %v239, %v238
    %v253 = vpack.c.b16 %v241, %v240
    %v254 = vpack.c.b16 %v243, %v242
    %v255 = vpack.c.b16 %v245, %v244
    %v256 = vpack.c.b16 %v247, %v246
    %v257 = vpack.c.b16 %v249, %v248
    %266 = vmatprep.subr.bf16.mxu0 0
    %267 = vmatpush1.bf16.msra.mxu0 %v257
    %268 = vmatprep.subr.bf16.mxu0 0
    %269 = vmatpush1.bf16.msra.mxu0 %v256
    %270 = vmatprep.subr.bf16.mxu0 0
    %271 = vmatpush1.bf16.msra.mxu0 %v255
    %272 = vmatprep.subr.bf16.mxu0 0
    %273 = vmatpush1.bf16.msra.mxu0 %v254
    %274 = vmatprep.subr.bf16.mxu0 0
    %275 = vmatpush1.bf16.msra.mxu0 %v253
    %276 = vmatprep.subr.bf16.mxu0 0
    %277 = vmatpush1.bf16.msra.mxu0 %v252
    %278 = vmatprep.subr.bf16.mxu0 0
    %279 = vmatpush1.bf16.msra.mxu0 %v251
    %280 = vmatprep.subr.bf16.mxu0 0
    %281 = vmatpush1.bf16.msra.mxu0 %v250
    %282 = vmatprep.subr.bf16.mxu0 0
    %283 = vmatpush2.bf16.msra.mxu0 0
    %284 = vmatprep.subr.bf16.mxu0 0
    %285 = vmatpush2.bf16.msra.mxu0 0
    %286 = vmatprep.subr.bf16.mxu0 0
    %287 = vmatpush2.bf16.msra.mxu0 0
    %288 = vmatprep.subr.bf16.mxu0 0
    %289 = vmatpush2.bf16.msra.mxu0 0
    %290 = vmatprep.subr.bf16.mxu0 0
    %291 = vmatpush2.bf16.msra.mxu0 0
    %292 = vmatprep.subr.bf16.mxu0 0
    %293 = vmatpush2.bf16.msra.mxu0 0
    %294 = vmatprep.subr.bf16.mxu0 0
    %295 = vmatpush2.bf16.msra.mxu0 0
    %296 = vmatprep.subr.bf16.mxu0 0
    %297 = vmatpush2.bf16.msra.mxu0 0
    %298 = vmatprep.mubr.bf16.mxu0 0
    %299 = vmatmul.mubr.bf16.gmra.mxu0 %v194
    %v300 = vpop.f32.mrf.mxu0
    %v301 = vadd.f32 %v216, %v300
    %v302 = vpop.f32.mrf.mxu0
    %v303 = vpop.f32.mrf.mxu0
    %v304 = vpop.f32.mrf.mxu0
    %305 = vdwg.mxu0
    %v306 = vmax.f32 %v301, 0.0
    %v307 = vpack.c.bf16 %v306, %v306
    %v308 = vld [vmem:[#allocation8] sm:$0xff]
    %v309 = vld [vmem:[#allocation8 + $0x8] sm:$0xff]
    %v310 = vld [vmem:[#allocation8 + $0x10] sm:$0xff]
    %v311 = vld [vmem:[#allocation8 + $0x18] sm:$0xff]
    %v312 = vld [vmem:[#allocation8 + $0x20] sm:$0xff]
    %v313 = vld [vmem:[#allocation8 + $0x28] sm:$0xff]
    %v314 = vld [vmem:[#allocation8 + $0x30] sm:$0xff]
    %v315 = vld [vmem:[#allocation8 + $0x38] sm:$0xff]
    %v316 = vld [vmem:[#allocation8 + $0x40] sm:$0xff]
    %v317 = vld [vmem:[#allocation8 + $0x48] sm:$0xff]
    %v318 = vld [vmem:[#allocation8 + $0x50] sm:$0xff]
    %v319 = vld [vmem:[#allocation8 + $0x58] sm:$0xff]
    %v320 = vld [vmem:[#allocation8 + $0x60] sm:$0xff]
    %v321 = vld [vmem:[#allocation8 + $0x68] sm:$0xff]
    %v322 = vld [vmem:[#allocation8 + $0x70] sm:$0xff]
    %v323 = vld [vmem:[#allocation8 + $0x78] sm:$0xff]
    %v324 = vld [vmem:[%s6] sm:$0x3]
    %v326 = vlaneseq
    %v327 = vshrl.u32 %v326, 7
    %v328 = vsub.s32 0, %v327
    %v329 = vrot.slane %v324, %v328
    %v330 = vlaneseq
    %v331 = vshrl.u32 %v330, 7
    %v332 = vsub.s32 1, %v331
    %v333 = vrot.slane %v324, %v332
    %v352 = vunpack.c.l.b16 %v308
    %v353 = vunpack.c.h.b16 %v308
    %v354 = vunpack.c.l.b16 %v309
    %v355 = vunpack.c.h.b16 %v309
    %v356 = vunpack.c.l.b16 %v310
    %v357 = vunpack.c.h.b16 %v310
    %v358 = vunpack.c.l.b16 %v311
    %v359 = vunpack.c.h.b16 %v311
    %v360 = vunpack.c.l.b16 %v312
    %v361 = vunpack.c.h.b16 %v312
    %v362 = vunpack.c.l.b16 %v313
    %v363 = vunpack.c.h.b16 %v313
    %v364 = vunpack.c.l.b16 %v314
    %v365 = vunpack.c.h.b16 %v314
    %v366 = vunpack.c.l.b16 %v315
    %v367 = vunpack.c.h.b16 %v315
    %v368 = vunpack.c.l.b16 %v316
    %v369 = vunpack.c.h.b16 %v316
    %v370 = vunpack.c.l.b16 %v317
    %v371 = vunpack.c.h.b16 %v317
    %v372 = vunpack.c.l.b16 %v318
    %v373 = vunpack.c.h.b16 %v318
    %v374 = vunpack.c.l.b16 %v319
    %v375 = vunpack.c.h.b16 %v319
    %v376 = vunpack.c.l.b16 %v320
    %v377 = vunpack.c.h.b16 %v320
    %v378 = vunpack.c.l.b16 %v321
    %v379 = vunpack.c.h.b16 %v321
    %v380 = vunpack.c.l.b16 %v322
    %v381 = vunpack.c.h.b16 %v322
    %v382 = vunpack.c.l.b16 %v323
    %v383 = vunpack.c.h.b16 %v323
    %v384 = vpack.c.b16 %v354, %v352
    %v385 = vpack.c.b16 %v355, %v353
    %v386 = vpack.c.b16 %v358, %v356
    %v387 = vpack.c.b16 %v359, %v357
    %v388 = vpack.c.b16 %v362, %v360
    %v389 = vpack.c.b16 %v363, %v361
    %v390 = vpack.c.b16 %v366, %v364
    %v391 = vpack.c.b16 %v367, %v365
    %v392 = vpack.c.b16 %v370, %v368
    %v393 = vpack.c.b16 %v371, %v369
    %v394 = vpack.c.b16 %v374, %v372
    %v395 = vpack.c.b16 %v375, %v373
    %v396 = vpack.c.b16 %v378, %v376
    %v397 = vpack.c.b16 %v379, %v377
    %v398 = vpack.c.b16 %v382, %v380
    %v399 = vpack.c.b16 %v383, %v381
    %416 = vmatprep.subr.bf16.mxu0 %v399
    %417 = vmatpush1.bf16.msra.mxu0 %v398
    %418 = vmatprep.subr.bf16.mxu0 %v397
    %419 = vmatpush1.bf16.msra.mxu0 %v396
    %420 = vmatprep.subr.bf16.mxu0 %v395
    %421 = vmatpush1.bf16.msra.mxu0 %v394
    %422 = vmatprep.subr.bf16.mxu0 %v393
    %423 = vmatpush1.bf16.msra.mxu0 %v392
    %424 = vmatprep.subr.bf16.mxu0 %v391
    %425 = vmatpush1.bf16.msra.mxu0 %v390
    %426 = vmatprep.subr.bf16.mxu0 %v389
    %427 = vmatpush1.bf16.msra.mxu0 %v388
    %428 = vmatprep.subr.bf16.mxu0 %v387
    %429 = vmatpush1.bf16.msra.mxu0 %v386
    %430 = vmatprep.subr.bf16.mxu0 %v385
    %431 = vmatpush1.bf16.msra.mxu0 %v384
    %432 = vmatprep.subr.bf16.mxu0 0
    %433 = vmatpush2.bf16.msra.mxu0 0
    %434 = vmatprep.subr.bf16.mxu0 0
    %435 = vmatpush2.bf16.msra.mxu0 0
    %436 = vmatprep.subr.bf16.mxu0 0
    %437 = vmatpush2.bf16.msra.mxu0 0
    %438 = vmatprep.subr.bf16.mxu0 0
    %439 = vmatpush2.bf16.msra.mxu0 0
    %440 = vmatprep.subr.bf16.mxu0 0
    %441 = vmatpush2.bf16.msra.mxu0 0
    %442 = vmatprep.subr.bf16.mxu0 0
    %443 = vmatpush2.bf16.msra.mxu0 0
    %444 = vmatprep.subr.bf16.mxu0 0
    %445 = vmatpush2.bf16.msra.mxu0 0
    %446 = vmatprep.subr.bf16.mxu0 0
    %447 = vmatpush2.bf16.msra.mxu0 0
    %448 = vmatprep.mubr.bf16.mxu0 0
    %449 = vmatmul.mubr.bf16.gmra.mxu0 %v307
    %v450 = vpop.f32.mrf.mxu0
    %v451 = vadd.f32 %v329, %v450
    %v452 = vpop.f32.mrf.mxu0
    %v453 = vadd.f32 %v333, %v452
    %v454 = vpop.f32.mrf.mxu0
    %v455 = vpop.f32.mrf.mxu0
    %456 = vdwg.mxu0
    %v457 = vtanh.pop %v451
    %v458 = vtanh.pop %v453
    %459 = vst [vmem:[#allocation10] sm:$0xff] %v457
    %460 = vst [vmem:[#allocation10 + $0x8] sm:$0xff] %v458
    // Predicated region
    $region46: #{tpu_custom_call.1} parent=1 // pred_check
      _
    $region47: #{tpu_custom_call.1} parent=1 // pred_check_branch
      %462 = sbr.rel (0) target = $region49
    $region48: #{tpu_custom_call.1} parent=1 // pred_region
      %s464 = ssub.s32 256, 256
      %465 = vsyncadd [#allocation4], %s464
      %s467 = sshll.u32 [#allocation10], 4
      %s468 = int_to_ptr.vmem [resolvable:$true] %s467
      %470 = dma.vmem_to_hbm [thread:$0]  %s468, 256, %s7, [#allocation4]
    $region49: #{tpu_custom_call.1} parent=1 // pred_fallthru
      _
    // Predicated region
    $region50: #{tpu_custom_call.1} parent=1 // pred_check
      _
    $region51: #{tpu_custom_call.1} parent=1 // pred_check_branch
      %472 = sbr.rel (0) target = $region53
    $region52: #{tpu_custom_call.1} parent=1 // pred_region
      %473 = dma.done [#allocation4], 256
    $region53: #{tpu_custom_call.1} parent=1 // pred_fallthru
      _
    %474 = vsyncpa [#allocation3], 1
    %475 = vsyncpa [#allocation6], 1
    %476 = vsyncpa [#allocation9], 1
    %477 = vsyncpa [#allocation4], 1

</llo_original>
